<compile_context>
chip_gen: v5e
topology: v5e:2x2
jax: 0.10.0
libtpu: 0.0.40
codegen_flags: <defaults>
</compile_context>

<pallas_src>
import jax
import jax.numpy as jnp
from jax import lax
from jax.experimental import pallas as pl
from jax.experimental.pallas import tpu as pltpu

BN_EPS = 1e-5


def basic_block_kernel(x_ref, w1_ref, b1_ref, g1_ref, be1_ref,
                       w2_ref, b2_ref, g2_ref, be2_ref, o_ref):
    # x_ref:  (N, C, L)      input, NCL (C on sublanes, L on lanes)
    # w*_ref: (Cout, K*Cin)  folded 7-tap conv weights, column index = k*Cin + ci
    # b*/g*/be*_ref: (C, 1)  conv bias / BN gamma / BN beta (lane-broadcast)
    N, C, L = x_ref.shape
    x = x_ref[...]

    lane = lax.broadcasted_iota(jnp.int32, (C, L), 1)   # lane index, reused by both convs

    def conv_block(inp, w_ref, b_ref):
        w = w_ref[...]                                  # (Cout, K*Cin)
        k_taps = w.shape[1] // C
        pad = (k_taps - 1) // 2
        outs = []
        for n in range(N):                              # N is tiny; static unroll
            xn = inp[n]                                 # (C, L)
            cols = []
            for k in range(k_taps):
                shift = pad - k                         # tap k reads x[l + k - pad]
                if shift == 0:
                    xs = xn
                else:
                    xs = pltpu.roll(xn, shift % L, axis=1)      # XLU lane rotate
                    if shift > 0:                               # zero wrapped edges
                        xs = jnp.where(lane >= shift, xs, 0.0)
                    else:
                        xs = jnp.where(lane < L + shift, xs, 0.0)
                cols.append(xs)
            xim = jnp.concatenate(cols, axis=0)          # (K*Cin, L) im2col slab
            outs.append(jnp.dot(w, xim,
                                preferred_element_type=jnp.float32))  # (Cout, L)
        y = jnp.stack(outs, axis=0)                      # (N, Cout, L)
        return y + b_ref[...][None, :, :]

    def batch_norm(y, g_ref, be_ref):
        # one-pass batch statistics over (N, L): E[y], E[y^2]
        inv_cnt = 1.0 / float(N * L)
        s = jnp.sum(y, axis=(0, 2), keepdims=True)       # (1, C, 1)
        ss = jnp.sum(y * y, axis=(0, 2), keepdims=True)
        m = s * inv_cnt
        v = ss * inv_cnt - m * m
        return ((y - m) * lax.rsqrt(v + BN_EPS)) * g_ref[...][None, :, :] \
               + be_ref[...][None, :, :]

    # ---- ConvBlock 1 -> BN -> ReLU ----
    y = jnp.maximum(batch_norm(conv_block(x, w1_ref, b1_ref), g1_ref, be1_ref), 0.0)

    # TODO(synk): nn.Dropout stochastic masking (torch RNG) not reproduced; treated as identity.

    # ---- ConvBlock 2 -> BN ----
    z = batch_norm(conv_block(y, w2_ref, b2_ref), g2_ref, be2_ref)

    # ---- residual add + ReLU (lane-dense full-tile store) ----
    o_ref[...] = jnp.maximum(z + x, 0.0)


def basic_block_forward(x_ncl, wc1, bc1, g1, be1, wc2, bc2, g2, be2):
    """x_ncl: (N, C, L) f32; wc*: (Cout, Cin, 7); bc*/g*/be*: (C,)."""
    N, C, L = x_ncl.shape
    K = wc1.shape[-1]

    # Fold weights to (Cout, K*Cin) with column index k*Cin + ci (matches kernel im2col).
    w1 = jnp.transpose(wc1, (0, 2, 1)).reshape(C, K * C)
    w2 = jnp.transpose(wc2, (0, 2, 1)).reshape(C, K * C)
    b1 = bc1.reshape(C, 1); b2 = bc2.reshape(C, 1)
    g1r = g1.reshape(C, 1); be1r = be1.reshape(C, 1)
    g2r = g2.reshape(C, 1); be2r = be2.reshape(C, 1)

    flops = 2 * (2 * N * L * K * C * C)                     # two folded convs
    bytes_accessed = 4 * (2 * N * C * L + 2 * (C * K * C + 3 * C))

    vmem = pl.BlockSpec(memory_space=pltpu.MemorySpace.VMEM)
    return pl.pallas_call(
        basic_block_kernel,
        out_shape=jax.ShapeDtypeStruct((N, C, L), jnp.float32),
        in_specs=[vmem] * 9,
        out_specs=vmem,
        cost_estimate=pl.CostEstimate(flops=flops, transcendentals=2 * C,
                                      bytes_accessed=bytes_accessed),
        compiler_params=pltpu.CompilerParams(vmem_limit_bytes=32 * 1024 * 1024),
    )(x_ncl, w1, b1, g1r, be1r, w2, b2, g2r, be2r)


# --------------------- parameter setup (deterministic) ---------------------

def init_conv(key, cin, cout, ksize):
    kw, kb = jax.random.split(key)
    bound = 1.0 / float(jnp.sqrt(float(cin * ksize)))
    w = jax.random.uniform(kw, (cout, cin, ksize), jnp.float32, -bound, bound)
    b = jax.random.uniform(kb, (cout,), jnp.float32, -bound, bound)
    return w, b


def init_convblock(key, cin, cout):
    """Fold conv1x3 + conv1x5 + conv1x7 ('same' padding) into one 7-tap conv."""
    k3, k5, k7 = jax.random.split(key, 3)
    w3, b3 = init_conv(k3, cin, cout, 3)
    w5, b5 = init_conv(k5, cin, cout, 5)
    w7, b7 = init_conv(k7, cin, cout, 7)
    wc = w7
    wc = wc.at[:, :, 1:6].add(w5)
    wc = wc.at[:, :, 2:5].add(w3)
    bc = b3 + b5 + b7
    return wc, bc


# --------------------------- pure-JAX reference ----------------------------

def reference(x, wc1, bc1, g1, be1, wc2, bc2, g2, be2):
    def conv(x, w, b):
        y = lax.conv_general_dilated(x, w, window_strides=(1,), padding=((3, 3),),
                                     dimension_numbers=('NCH', 'OIH', 'NCH'))
        return y + b.reshape(1, -1, 1)

    def bn(y, g, be):
        m = jnp.mean(y, axis=(0, 2), keepdims=True)
        v = jnp.mean((y - m) ** 2, axis=(0, 2), keepdims=True)
        return (y - m) * lax.rsqrt(v + BN_EPS) * g.reshape(1, -1, 1) + be.reshape(1, -1, 1)

    y = jnp.maximum(bn(conv(x, wc1, bc1), g1, be1), 0.0)
    z = bn(conv(y, wc2, bc2), g2, be2)
    return jnp.maximum(z + x, 0.0)


if __name__ == "__main__":
    key = jax.random.PRNGKey(0)
    N, C, L = 2, 8, 128          # residual add requires in_channels == out_channels

    kx, kc1, kc2 = jax.random.split(key, 3)
    x = jax.random.normal(kx, (N, C, L), jnp.float32)

    wc1, bc1 = init_convblock(kc1, C, C)
    wc2, bc2 = init_convblock(kc2, C, C)
    # BatchNorm1d default init: weight=1, bias=0
    g1 = jnp.ones((C,), jnp.float32); be1 = jnp.zeros((C,), jnp.float32)
    g2 = jnp.ones((C,), jnp.float32); be2 = jnp.zeros((C,), jnp.float32)

    out = basic_block_forward(x, wc1, bc1, g1, be1, wc2, bc2, g2, be2)
    out = jax.block_until_ready(out)

    ref = reference(x, wc1, bc1, g1, be1, wc2, bc2, g2, be2)
    max_err = float(jnp.max(jnp.abs(out - ref)))
    if max_err > 1e-3:
        raise AssertionError(f"mismatch vs reference, max abs err = {max_err}")

    print("KERNEL_OK")
</pallas_src>

<mosaic_0001>
module attributes {stable_mosaic.version = 11 : i64} {
  func.func @basic_block_kernel(%arg0: memref<2x8x128xf32, #tpu.memory_space<vmem>>, %arg1: memref<8x56xf32, #tpu.memory_space<vmem>>, %arg2: memref<8x1xf32, #tpu.memory_space<vmem>>, %arg3: memref<8x1xf32, #tpu.memory_space<vmem>>, %arg4: memref<8x1xf32, #tpu.memory_space<vmem>>, %arg5: memref<8x56xf32, #tpu.memory_space<vmem>>, %arg6: memref<8x1xf32, #tpu.memory_space<vmem>>, %arg7: memref<8x1xf32, #tpu.memory_space<vmem>>, %arg8: memref<8x1xf32, #tpu.memory_space<vmem>>, %arg9: memref<2x8x128xf32, #tpu.memory_space<vmem>>) attributes {dimension_semantics = [], scalar_prefetch = 0 : i64, scratch_operands = 0 : i64, tpu.core_type = #tpu.core_type<tc>} {
    %c0 = arith.constant 0 : index
    %c0_0 = arith.constant 0 : index
    %c0_1 = arith.constant 0 : index
    %0 = vector.load %arg0[%c0, %c0_0, %c0_1] : memref<2x8x128xf32, #tpu.memory_space<vmem>>, vector<2x8x128xf32>
    %1 = tpu.iota {dimensions = array<i32: 1>} : vector<8x128xi32>
    %c0_2 = arith.constant 0 : index
    %c0_3 = arith.constant 0 : index
    %2 = vector.load %arg1[%c0_2, %c0_3] : memref<8x56xf32, #tpu.memory_space<vmem>>, vector<8x56xf32>
    %3 = vector.extract_strided_slice %0 {offsets = [0, 0, 0], sizes = [1, 8, 128], strides = [1, 1, 1]} : vector<2x8x128xf32> to vector<1x8x128xf32>
    %4 = vector.shape_cast %3 : vector<1x8x128xf32> to vector<8x128xf32>
    %c3_i32 = arith.constant 3 : i32
    %5 = tpu.dynamic_rotate %4 by %c3_i32 dim 1 : vector<8x128xf32>, i32 -> vector<8x128xf32>
    %c3_i32_4 = arith.constant 3 : i32
    %6 = vector.broadcast %c3_i32_4 : i32 to vector<8x128xi32>
    %7 = arith.cmpi sge, %1, %6 : vector<8x128xi32>
    %cst = arith.constant 0.000000e+00 : f32
    %8 = vector.broadcast %cst : f32 to vector<8x128xf32>
    %9 = arith.select %7, %5, %8 : vector<8x128xi1>, vector<8x128xf32>
    %c2_i32 = arith.constant 2 : i32
    %10 = tpu.dynamic_rotate %4 by %c2_i32 dim 1 : vector<8x128xf32>, i32 -> vector<8x128xf32>
    %c2_i32_5 = arith.constant 2 : i32
    %11 = vector.broadcast %c2_i32_5 : i32 to vector<8x128xi32>
    %12 = arith.cmpi sge, %1, %11 : vector<8x128xi32>
    %cst_6 = arith.constant 0.000000e+00 : f32
    %13 = vector.broadcast %cst_6 : f32 to vector<8x128xf32>
    %14 = arith.select %12, %10, %13 : vector<8x128xi1>, vector<8x128xf32>
    %c1_i32 = arith.constant 1 : i32
    %15 = tpu.dynamic_rotate %4 by %c1_i32 dim 1 : vector<8x128xf32>, i32 -> vector<8x128xf32>
    %c1_i32_7 = arith.constant 1 : i32
    %16 = vector.broadcast %c1_i32_7 : i32 to vector<8x128xi32>
    %17 = arith.cmpi sge, %1, %16 : vector<8x128xi32>
    %cst_8 = arith.constant 0.000000e+00 : f32
    %18 = vector.broadcast %cst_8 : f32 to vector<8x128xf32>
    %19 = arith.select %17, %15, %18 : vector<8x128xi1>, vector<8x128xf32>
    %c127_i32 = arith.constant 127 : i32
    %20 = tpu.dynamic_rotate %4 by %c127_i32 dim 1 : vector<8x128xf32>, i32 -> vector<8x128xf32>
    %c127_i32_9 = arith.constant 127 : i32
    %21 = vector.broadcast %c127_i32_9 : i32 to vector<8x128xi32>
    %22 = arith.cmpi slt, %1, %21 : vector<8x128xi32>
    %cst_10 = arith.constant 0.000000e+00 : f32
    %23 = vector.broadcast %cst_10 : f32 to vector<8x128xf32>
    %24 = arith.select %22, %20, %23 : vector<8x128xi1>, vector<8x128xf32>
    %c126_i32 = arith.constant 126 : i32
    %25 = tpu.dynamic_rotate %4 by %c126_i32 dim 1 : vector<8x128xf32>, i32 -> vector<8x128xf32>
    %c126_i32_11 = arith.constant 126 : i32
    %26 = vector.broadcast %c126_i32_11 : i32 to vector<8x128xi32>
    %27 = arith.cmpi slt, %1, %26 : vector<8x128xi32>
    %cst_12 = arith.constant 0.000000e+00 : f32
    %28 = vector.broadcast %cst_12 : f32 to vector<8x128xf32>
    %29 = arith.select %27, %25, %28 : vector<8x128xi1>, vector<8x128xf32>
    %c125_i32 = arith.constant 125 : i32
    %30 = tpu.dynamic_rotate %4 by %c125_i32 dim 1 : vector<8x128xf32>, i32 -> vector<8x128xf32>
    %c125_i32_13 = arith.constant 125 : i32
    %31 = vector.broadcast %c125_i32_13 : i32 to vector<8x128xi32>
    %32 = arith.cmpi slt, %1, %31 : vector<8x128xi32>
    %cst_14 = arith.constant 0.000000e+00 : f32
    %33 = vector.broadcast %cst_14 : f32 to vector<8x128xf32>
    %34 = arith.select %32, %30, %33 : vector<8x128xi1>, vector<8x128xf32>
    %35 = tpu.concatenate %9, %14, %19, %4, %24, %29, %34 in 0 : vector<8x128xf32>, vector<8x128xf32>, vector<8x128xf32>, vector<8x128xf32>, vector<8x128xf32>, vector<8x128xf32>, vector<8x128xf32> -> vector<56x128xf32>
    %cst_15 = arith.constant dense<0.000000e+00> : vector<8x128xf32>
    %36 = tpu.matmul %2, %35, %cst_15 {dimension_numbers = #tpu.dot_dimension_numbers<[1], [0], [0], [1], [0, 0, 1, 1], [], []>} : vector<8x56xf32>, vector<56x128xf32>, vector<8x128xf32> -> vector<8x128xf32>
    %37 = vector.extract_strided_slice %0 {offsets = [1, 0, 0], sizes = [1, 8, 128], strides = [1, 1, 1]} : vector<2x8x128xf32> to vector<1x8x128xf32>
    %38 = vector.shape_cast %37 : vector<1x8x128xf32> to vector<8x128xf32>
    %c3_i32_16 = arith.constant 3 : i32
    %39 = tpu.dynamic_rotate %38 by %c3_i32_16 dim 1 : vector<8x128xf32>, i32 -> vector<8x128xf32>
    %c3_i32_17 = arith.constant 3 : i32
    %40 = vector.broadcast %c3_i32_17 : i32 to vector<8x128xi32>
    %41 = arith.cmpi sge, %1, %40 : vector<8x128xi32>
    %cst_18 = arith.constant 0.000000e+00 : f32
    %42 = vector.broadcast %cst_18 : f32 to vector<8x128xf32>
    %43 = arith.select %41, %39, %42 : vector<8x128xi1>, vector<8x128xf32>
    %c2_i32_19 = arith.constant 2 : i32
    %44 = tpu.dynamic_rotate %38 by %c2_i32_19 dim 1 : vector<8x128xf32>, i32 -> vector<8x128xf32>
    %c2_i32_20 = arith.constant 2 : i32
    %45 = vector.broadcast %c2_i32_20 : i32 to vector<8x128xi32>
    %46 = arith.cmpi sge, %1, %45 : vector<8x128xi32>
    %cst_21 = arith.constant 0.000000e+00 : f32
    %47 = vector.broadcast %cst_21 : f32 to vector<8x128xf32>
    %48 = arith.select %46, %44, %47 : vector<8x128xi1>, vector<8x128xf32>
    %c1_i32_22 = arith.constant 1 : i32
    %49 = tpu.dynamic_rotate %38 by %c1_i32_22 dim 1 : vector<8x128xf32>, i32 -> vector<8x128xf32>
    %c1_i32_23 = arith.constant 1 : i32
    %50 = vector.broadcast %c1_i32_23 : i32 to vector<8x128xi32>
    %51 = arith.cmpi sge, %1, %50 : vector<8x128xi32>
    %cst_24 = arith.constant 0.000000e+00 : f32
    %52 = vector.broadcast %cst_24 : f32 to vector<8x128xf32>
    %53 = arith.select %51, %49, %52 : vector<8x128xi1>, vector<8x128xf32>
    %c127_i32_25 = arith.constant 127 : i32
    %54 = tpu.dynamic_rotate %38 by %c127_i32_25 dim 1 : vector<8x128xf32>, i32 -> vector<8x128xf32>
    %c127_i32_26 = arith.constant 127 : i32
    %55 = vector.broadcast %c127_i32_26 : i32 to vector<8x128xi32>
    %56 = arith.cmpi slt, %1, %55 : vector<8x128xi32>
    %cst_27 = arith.constant 0.000000e+00 : f32
    %57 = vector.broadcast %cst_27 : f32 to vector<8x128xf32>
    %58 = arith.select %56, %54, %57 : vector<8x128xi1>, vector<8x128xf32>
    %c126_i32_28 = arith.constant 126 : i32
    %59 = tpu.dynamic_rotate %38 by %c126_i32_28 dim 1 : vector<8x128xf32>, i32 -> vector<8x128xf32>
    %c126_i32_29 = arith.constant 126 : i32
    %60 = vector.broadcast %c126_i32_29 : i32 to vector<8x128xi32>
    %61 = arith.cmpi slt, %1, %60 : vector<8x128xi32>
    %cst_30 = arith.constant 0.000000e+00 : f32
    %62 = vector.broadcast %cst_30 : f32 to vector<8x128xf32>
    %63 = arith.select %61, %59, %62 : vector<8x128xi1>, vector<8x128xf32>
    %c125_i32_31 = arith.constant 125 : i32
    %64 = tpu.dynamic_rotate %38 by %c125_i32_31 dim 1 : vector<8x128xf32>, i32 -> vector<8x128xf32>
    %c125_i32_32 = arith.constant 125 : i32
    %65 = vector.broadcast %c125_i32_32 : i32 to vector<8x128xi32>
    %66 = arith.cmpi slt, %1, %65 : vector<8x128xi32>
    %cst_33 = arith.constant 0.000000e+00 : f32
    %67 = vector.broadcast %cst_33 : f32 to vector<8x128xf32>
    %68 = arith.select %66, %64, %67 : vector<8x128xi1>, vector<8x128xf32>
    %69 = tpu.concatenate %43, %48, %53, %38, %58, %63, %68 in 0 : vector<8x128xf32>, vector<8x128xf32>, vector<8x128xf32>, vector<8x128xf32>, vector<8x128xf32>, vector<8x128xf32>, vector<8x128xf32> -> vector<56x128xf32>
    %cst_34 = arith.constant dense<0.000000e+00> : vector<8x128xf32>
    %70 = tpu.matmul %2, %69, %cst_34 {dimension_numbers = #tpu.dot_dimension_numbers<[1], [0], [0], [1], [0, 0, 1, 1], [], []>} : vector<8x56xf32>, vector<56x128xf32>, vector<8x128xf32> -> vector<8x128xf32>
    %71 = vector.shape_cast %36 : vector<8x128xf32> to vector<1x8x128xf32>
    %72 = vector.shape_cast %70 : vector<8x128xf32> to vector<1x8x128xf32>
    %73 = tpu.concatenate %71, %72 in 0 : vector<1x8x128xf32>, vector<1x8x128xf32> -> vector<2x8x128xf32>
    %c0_35 = arith.constant 0 : index
    %c0_36 = arith.constant 0 : index
    %74 = vector.load %arg2[%c0_35, %c0_36] : memref<8x1xf32, #tpu.memory_space<vmem>>, vector<8x1xf32>
    %75 = vector.shape_cast %74 : vector<8x1xf32> to vector<1x8x1xf32>
    %76 = vector.broadcast %75 : vector<1x8x1xf32> to vector<2x8x128xf32>
    %77 = arith.addf %73, %76 : vector<2x8x128xf32>
    %cst_37 = arith.constant dense<0.000000e+00> : vector<8xf32>
    %78 = vector.multi_reduction <add>, %77, %cst_37 [0, 2] : vector<2x8x128xf32> to vector<8xf32>
    %79 = vector.shape_cast %78 : vector<8xf32> to vector<1x8x1xf32>
    %80 = arith.mulf %77, %77 : vector<2x8x128xf32>
    %cst_38 = arith.constant dense<0.000000e+00> : vector<8xf32>
    %81 = vector.multi_reduction <add>, %80, %cst_38 [0, 2] : vector<2x8x128xf32> to vector<8xf32>
    %82 = vector.shape_cast %81 : vector<8xf32> to vector<1x8x1xf32>
    %cst_39 = arith.constant 3.906250e-03 : f32
    %83 = vector.broadcast %cst_39 : f32 to vector<1x8x1xf32>
    %84 = arith.mulf %79, %83 : vector<1x8x1xf32>
    %cst_40 = arith.constant 3.906250e-03 : f32
    %85 = vector.broadcast %cst_40 : f32 to vector<1x8x1xf32>
    %86 = arith.mulf %82, %85 : vector<1x8x1xf32>
    %87 = arith.mulf %84, %84 : vector<1x8x1xf32>
    %88 = arith.subf %86, %87 : vector<1x8x1xf32>
    %89 = vector.broadcast %84 : vector<1x8x1xf32> to vector<2x8x128xf32>
    %90 = arith.subf %77, %89 : vector<2x8x128xf32>
    %cst_41 = arith.constant 9.99999974E-6 : f32
    %91 = vector.broadcast %cst_41 : f32 to vector<1x8x1xf32>
    %92 = arith.addf %88, %91 : vector<1x8x1xf32>
    %93 = math.rsqrt %92 : vector<1x8x1xf32>
    %94 = vector.broadcast %93 : vector<1x8x1xf32> to vector<2x8x128xf32>
    %95 = arith.mulf %90, %94 : vector<2x8x128xf32>
    %c0_42 = arith.constant 0 : index
    %c0_43 = arith.constant 0 : index
    %96 = vector.load %arg3[%c0_42, %c0_43] : memref<8x1xf32, #tpu.memory_space<vmem>>, vector<8x1xf32>
    %97 = vector.shape_cast %96 : vector<8x1xf32> to vector<1x8x1xf32>
    %98 = vector.broadcast %97 : vector<1x8x1xf32> to vector<2x8x128xf32>
    %99 = arith.mulf %95, %98 : vector<2x8x128xf32>
    %c0_44 = arith.constant 0 : index
    %c0_45 = arith.constant 0 : index
    %100 = vector.load %arg4[%c0_44, %c0_45] : memref<8x1xf32, #tpu.memory_space<vmem>>, vector<8x1xf32>
    %101 = vector.shape_cast %100 : vector<8x1xf32> to vector<1x8x1xf32>
    %102 = vector.broadcast %101 : vector<1x8x1xf32> to vector<2x8x128xf32>
    %103 = arith.addf %99, %102 : vector<2x8x128xf32>
    %cst_46 = arith.constant 0.000000e+00 : f32
    %104 = vector.broadcast %cst_46 : f32 to vector<2x8x128xf32>
    %105 = arith.maximumf %103, %104 : vector<2x8x128xf32>
    %c0_47 = arith.constant 0 : index
    %c0_48 = arith.constant 0 : index
    %106 = vector.load %arg5[%c0_47, %c0_48] : memref<8x56xf32, #tpu.memory_space<vmem>>, vector<8x56xf32>
    %107 = vector.extract_strided_slice %105 {offsets = [0, 0, 0], sizes = [1, 8, 128], strides = [1, 1, 1]} : vector<2x8x128xf32> to vector<1x8x128xf32>
    %108 = vector.shape_cast %107 : vector<1x8x128xf32> to vector<8x128xf32>
    %c3_i32_49 = arith.constant 3 : i32
    %109 = tpu.dynamic_rotate %108 by %c3_i32_49 dim 1 : vector<8x128xf32>, i32 -> vector<8x128xf32>
    %c3_i32_50 = arith.constant 3 : i32
    %110 = vector.broadcast %c3_i32_50 : i32 to vector<8x128xi32>
    %111 = arith.cmpi sge, %1, %110 : vector<8x128xi32>
    %cst_51 = arith.constant 0.000000e+00 : f32
    %112 = vector.broadcast %cst_51 : f32 to vector<8x128xf32>
    %113 = arith.select %111, %109, %112 : vector<8x128xi1>, vector<8x128xf32>
    %c2_i32_52 = arith.constant 2 : i32
    %114 = tpu.dynamic_rotate %108 by %c2_i32_52 dim 1 : vector<8x128xf32>, i32 -> vector<8x128xf32>
    %c2_i32_53 = arith.constant 2 : i32
    %115 = vector.broadcast %c2_i32_53 : i32 to vector<8x128xi32>
    %116 = arith.cmpi sge, %1, %115 : vector<8x128xi32>
    %cst_54 = arith.constant 0.000000e+00 : f32
    %117 = vector.broadcast %cst_54 : f32 to vector<8x128xf32>
    %118 = arith.select %116, %114, %117 : vector<8x128xi1>, vector<8x128xf32>
    %c1_i32_55 = arith.constant 1 : i32
    %119 = tpu.dynamic_rotate %108 by %c1_i32_55 dim 1 : vector<8x128xf32>, i32 -> vector<8x128xf32>
    %c1_i32_56 = arith.constant 1 : i32
    %120 = vector.broadcast %c1_i32_56 : i32 to vector<8x128xi32>
    %121 = arith.cmpi sge, %1, %120 : vector<8x128xi32>
    %cst_57 = arith.constant 0.000000e+00 : f32
    %122 = vector.broadcast %cst_57 : f32 to vector<8x128xf32>
    %123 = arith.select %121, %119, %122 : vector<8x128xi1>, vector<8x128xf32>
    %c127_i32_58 = arith.constant 127 : i32
    %124 = tpu.dynamic_rotate %108 by %c127_i32_58 dim 1 : vector<8x128xf32>, i32 -> vector<8x128xf32>
    %c127_i32_59 = arith.constant 127 : i32
    %125 = vector.broadcast %c127_i32_59 : i32 to vector<8x128xi32>
    %126 = arith.cmpi slt, %1, %125 : vector<8x128xi32>
    %cst_60 = arith.constant 0.000000e+00 : f32
    %127 = vector.broadcast %cst_60 : f32 to vector<8x128xf32>
    %128 = arith.select %126, %124, %127 : vector<8x128xi1>, vector<8x128xf32>
    %c126_i32_61 = arith.constant 126 : i32
    %129 = tpu.dynamic_rotate %108 by %c126_i32_61 dim 1 : vector<8x128xf32>, i32 -> vector<8x128xf32>
    %c126_i32_62 = arith.constant 126 : i32
    %130 = vector.broadcast %c126_i32_62 : i32 to vector<8x128xi32>
    %131 = arith.cmpi slt, %1, %130 : vector<8x128xi32>
    %cst_63 = arith.constant 0.000000e+00 : f32
    %132 = vector.broadcast %cst_63 : f32 to vector<8x128xf32>
    %133 = arith.select %131, %129, %132 : vector<8x128xi1>, vector<8x128xf32>
    %c125_i32_64 = arith.constant 125 : i32
    %134 = tpu.dynamic_rotate %108 by %c125_i32_64 dim 1 : vector<8x128xf32>, i32 -> vector<8x128xf32>
    %c125_i32_65 = arith.constant 125 : i32
    %135 = vector.broadcast %c125_i32_65 : i32 to vector<8x128xi32>
    %136 = arith.cmpi slt, %1, %135 : vector<8x128xi32>
    %cst_66 = arith.constant 0.000000e+00 : f32
    %137 = vector.broadcast %cst_66 : f32 to vector<8x128xf32>
    %138 = arith.select %136, %134, %137 : vector<8x128xi1>, vector<8x128xf32>
    %139 = tpu.concatenate %113, %118, %123, %108, %128, %133, %138 in 0 : vector<8x128xf32>, vector<8x128xf32>, vector<8x128xf32>, vector<8x128xf32>, vector<8x128xf32>, vector<8x128xf32>, vector<8x128xf32> -> vector<56x128xf32>
    %cst_67 = arith.constant dense<0.000000e+00> : vector<8x128xf32>
    %140 = tpu.matmul %106, %139, %cst_67 {dimension_numbers = #tpu.dot_dimension_numbers<[1], [0], [0], [1], [0, 0, 1, 1], [], []>} : vector<8x56xf32>, vector<56x128xf32>, vector<8x128xf32> -> vector<8x128xf32>
    %141 = vector.extract_strided_slice %105 {offsets = [1, 0, 0], sizes = [1, 8, 128], strides = [1, 1, 1]} : vector<2x8x128xf32> to vector<1x8x128xf32>
    %142 = vector.shape_cast %141 : vector<1x8x128xf32> to vector<8x128xf32>
    %c3_i32_68 = arith.constant 3 : i32
    %143 = tpu.dynamic_rotate %142 by %c3_i32_68 dim 1 : vector<8x128xf32>, i32 -> vector<8x128xf32>
    %c3_i32_69 = arith.constant 3 : i32
    %144 = vector.broadcast %c3_i32_69 : i32 to vector<8x128xi32>
    %145 = arith.cmpi sge, %1, %144 : vector<8x128xi32>
    %cst_70 = arith.constant 0.000000e+00 : f32
    %146 = vector.broadcast %cst_70 : f32 to vector<8x128xf32>
    %147 = arith.select %145, %143, %146 : vector<8x128xi1>, vector<8x128xf32>
    %c2_i32_71 = arith.constant 2 : i32
    %148 = tpu.dynamic_rotate %142 by %c2_i32_71 dim 1 : vector<8x128xf32>, i32 -> vector<8x128xf32>
    %c2_i32_72 = arith.constant 2 : i32
    %149 = vector.broadcast %c2_i32_72 : i32 to vector<8x128xi32>
    %150 = arith.cmpi sge, %1, %149 : vector<8x128xi32>
    %cst_73 = arith.constant 0.000000e+00 : f32
    %151 = vector.broadcast %cst_73 : f32 to vector<8x128xf32>
    %152 = arith.select %150, %148, %151 : vector<8x128xi1>, vector<8x128xf32>
    %c1_i32_74 = arith.constant 1 : i32
    %153 = tpu.dynamic_rotate %142 by %c1_i32_74 dim 1 : vector<8x128xf32>, i32 -> vector<8x128xf32>
    %c1_i32_75 = arith.constant 1 : i32
    %154 = vector.broadcast %c1_i32_75 : i32 to vector<8x128xi32>
    %155 = arith.cmpi sge, %1, %154 : vector<8x128xi32>
    %cst_76 = arith.constant 0.000000e+00 : f32
    %156 = vector.broadcast %cst_76 : f32 to vector<8x128xf32>
    %157 = arith.select %155, %153, %156 : vector<8x128xi1>, vector<8x128xf32>
    %c127_i32_77 = arith.constant 127 : i32
    %158 = tpu.dynamic_rotate %142 by %c127_i32_77 dim 1 : vector<8x128xf32>, i32 -> vector<8x128xf32>
    %c127_i32_78 = arith.constant 127 : i32
    %159 = vector.broadcast %c127_i32_78 : i32 to vector<8x128xi32>
    %160 = arith.cmpi slt, %1, %159 : vector<8x128xi32>
    %cst_79 = arith.constant 0.000000e+00 : f32
    %161 = vector.broadcast %cst_79 : f32 to vector<8x128xf32>
    %162 = arith.select %160, %158, %161 : vector<8x128xi1>, vector<8x128xf32>
    %c126_i32_80 = arith.constant 126 : i32
    %163 = tpu.dynamic_rotate %142 by %c126_i32_80 dim 1 : vector<8x128xf32>, i32 -> vector<8x128xf32>
    %c126_i32_81 = arith.constant 126 : i32
    %164 = vector.broadcast %c126_i32_81 : i32 to vector<8x128xi32>
    %165 = arith.cmpi slt, %1, %164 : vector<8x128xi32>
    %cst_82 = arith.constant 0.000000e+00 : f32
    %166 = vector.broadcast %cst_82 : f32 to vector<8x128xf32>
    %167 = arith.select %165, %163, %166 : vector<8x128xi1>, vector<8x128xf32>
    %c125_i32_83 = arith.constant 125 : i32
    %168 = tpu.dynamic_rotate %142 by %c125_i32_83 dim 1 : vector<8x128xf32>, i32 -> vector<8x128xf32>
    %c125_i32_84 = arith.constant 125 : i32
    %169 = vector.broadcast %c125_i32_84 : i32 to vector<8x128xi32>
    %170 = arith.cmpi slt, %1, %169 : vector<8x128xi32>
    %cst_85 = arith.constant 0.000000e+00 : f32
    %171 = vector.broadcast %cst_85 : f32 to vector<8x128xf32>
    %172 = arith.select %170, %168, %171 : vector<8x128xi1>, vector<8x128xf32>
    %173 = tpu.concatenate %147, %152, %157, %142, %162, %167, %172 in 0 : vector<8x128xf32>, vector<8x128xf32>, vector<8x128xf32>, vector<8x128xf32>, vector<8x128xf32>, vector<8x128xf32>, vector<8x128xf32> -> vector<56x128xf32>
    %cst_86 = arith.constant dense<0.000000e+00> : vector<8x128xf32>
    %174 = tpu.matmul %106, %173, %cst_86 {dimension_numbers = #tpu.dot_dimension_numbers<[1], [0], [0], [1], [0, 0, 1, 1], [], []>} : vector<8x56xf32>, vector<56x128xf32>, vector<8x128xf32> -> vector<8x128xf32>
    %175 = vector.shape_cast %140 : vector<8x128xf32> to vector<1x8x128xf32>
    %176 = vector.shape_cast %174 : vector<8x128xf32> to vector<1x8x128xf32>
    %177 = tpu.concatenate %175, %176 in 0 : vector<1x8x128xf32>, vector<1x8x128xf32> -> vector<2x8x128xf32>
    %c0_87 = arith.constant 0 : index
    %c0_88 = arith.constant 0 : index
    %178 = vector.load %arg6[%c0_87, %c0_88] : memref<8x1xf32, #tpu.memory_space<vmem>>, vector<8x1xf32>
    %179 = vector.shape_cast %178 : vector<8x1xf32> to vector<1x8x1xf32>
    %180 = vector.broadcast %179 : vector<1x8x1xf32> to vector<2x8x128xf32>
    %181 = arith.addf %177, %180 : vector<2x8x128xf32>
    %cst_89 = arith.constant dense<0.000000e+00> : vector<8xf32>
    %182 = vector.multi_reduction <add>, %181, %cst_89 [0, 2] : vector<2x8x128xf32> to vector<8xf32>
    %183 = vector.shape_cast %182 : vector<8xf32> to vector<1x8x1xf32>
    %184 = arith.mulf %181, %181 : vector<2x8x128xf32>
    %cst_90 = arith.constant dense<0.000000e+00> : vector<8xf32>
    %185 = vector.multi_reduction <add>, %184, %cst_90 [0, 2] : vector<2x8x128xf32> to vector<8xf32>
    %186 = vector.shape_cast %185 : vector<8xf32> to vector<1x8x1xf32>
    %cst_91 = arith.constant 3.906250e-03 : f32
    %187 = vector.broadcast %cst_91 : f32 to vector<1x8x1xf32>
    %188 = arith.mulf %183, %187 : vector<1x8x1xf32>
    %cst_92 = arith.constant 3.906250e-03 : f32
    %189 = vector.broadcast %cst_92 : f32 to vector<1x8x1xf32>
    %190 = arith.mulf %186, %189 : vector<1x8x1xf32>
    %191 = arith.mulf %188, %188 : vector<1x8x1xf32>
    %192 = arith.subf %190, %191 : vector<1x8x1xf32>
    %193 = vector.broadcast %188 : vector<1x8x1xf32> to vector<2x8x128xf32>
    %194 = arith.subf %181, %193 : vector<2x8x128xf32>
    %cst_93 = arith.constant 9.99999974E-6 : f32
    %195 = vector.broadcast %cst_93 : f32 to vector<1x8x1xf32>
    %196 = arith.addf %192, %195 : vector<1x8x1xf32>
    %197 = math.rsqrt %196 : vector<1x8x1xf32>
    %198 = vector.broadcast %197 : vector<1x8x1xf32> to vector<2x8x128xf32>
    %199 = arith.mulf %194, %198 : vector<2x8x128xf32>
    %c0_94 = arith.constant 0 : index
    %c0_95 = arith.constant 0 : index
    %200 = vector.load %arg7[%c0_94, %c0_95] : memref<8x1xf32, #tpu.memory_space<vmem>>, vector<8x1xf32>
    %201 = vector.shape_cast %200 : vector<8x1xf32> to vector<1x8x1xf32>
    %202 = vector.broadcast %201 : vector<1x8x1xf32> to vector<2x8x128xf32>
    %203 = arith.mulf %199, %202 : vector<2x8x128xf32>
    %c0_96 = arith.constant 0 : index
    %c0_97 = arith.constant 0 : index
    %204 = vector.load %arg8[%c0_96, %c0_97] : memref<8x1xf32, #tpu.memory_space<vmem>>, vector<8x1xf32>
    %205 = vector.shape_cast %204 : vector<8x1xf32> to vector<1x8x1xf32>
    %206 = vector.broadcast %205 : vector<1x8x1xf32> to vector<2x8x128xf32>
    %207 = arith.addf %203, %206 : vector<2x8x128xf32>
    %208 = arith.addf %207, %0 : vector<2x8x128xf32>
    %cst_98 = arith.constant 0.000000e+00 : f32
    %209 = vector.broadcast %cst_98 : f32 to vector<2x8x128xf32>
    %210 = arith.maximumf %208, %209 : vector<2x8x128xf32>
    %c0_99 = arith.constant 0 : index
    %c0_100 = arith.constant 0 : index
    %c0_101 = arith.constant 0 : index
    %211 = vector.load %arg9[%c0_99, %c0_100, %c0_101] : memref<2x8x128xf32, #tpu.memory_space<vmem>>, vector<2x8x128xf32>
    tpu.vector_store %arg9[%c0_99, %c0_100, %c0_101], %210 {strides = array<i32>} : memref<2x8x128xf32, #tpu.memory_space<vmem>>, vector<2x8x128xf32>,
    return
  }
}

</mosaic_0001>

<llo_original>
// kernel: tpu_custom_call.1
$region0: #{tpu_custom_call.1}
  #allocation0 [shape = 'u32[]', space=smem, size = 0x4, offset = 0x4, fixed_abs, tag = 'smem constant byte address 0x4 - core index']
  #allocation1 [shape = 'u32[72,128]{1,0:T(1,128)}', space=vmem, size = 0x9000, scoped, tag = 'internal scratch']
  %s0 = inlined_call_operand.vmem [shape: f32[2,8,128], index: 0, kind: input, shape index: {}]
  %s1 = inlined_call_operand.vmem [shape: f32[8,56], index: 1, kind: input, shape index: {}]
  %s2 = inlined_call_operand.vmem [shape: f32[8,1], index: 2, kind: input, shape index: {}]
  %s3 = inlined_call_operand.vmem [shape: f32[8,1], index: 3, kind: input, shape index: {}]
  %s4 = inlined_call_operand.vmem [shape: f32[8,1], index: 4, kind: input, shape index: {}]
  %s5 = inlined_call_operand.vmem [shape: f32[8,56], index: 5, kind: input, shape index: {}]
  %s6 = inlined_call_operand.vmem [shape: f32[8,1], index: 6, kind: input, shape index: {}]
  %s7 = inlined_call_operand.vmem [shape: f32[8,1], index: 7, kind: input, shape index: {}]
  %s8 = inlined_call_operand.vmem [shape: f32[8,1], index: 8, kind: input, shape index: {}]
  %s9 = inlined_call_operand.hbm [shape: f32[2,8,128], index: 9, kind: output, shape index: {}]
  %s10 = sld [smem:[#allocation0]]
  $region46: #{tpu_custom_call.1} parent=0
    _
  %s12 = ssub.s32 1, %s10
  %s13 = scalar_select 0, %s12, %s10
  $region1: #{tpu_custom_call.1} parent=0
    #allocation2 [shape = 'u8[8192]{0}', space=vmem, size = 0x2000, scoped, tag = 'output window, operand 0, single buffered']
    #allocation3 [shape = 's32[1]{0}', space=sflag, size = 0x4, scoped, tag = 'scoped memory for tpu_custom_call.1']
    %14 = vsyncpa [#allocation3], 0
    // Predicated region
    $region2: #{tpu_custom_call.1} parent=1 // pred_check
      _
    $region3: #{tpu_custom_call.1} parent=1 // pred_check_branch
      %16 = sbr.rel (0) target = $region5
    $region4: #{tpu_custom_call.1} parent=1 // pred_region
      _
    $region5: #{tpu_custom_call.1} parent=1 // pred_fallthru
      _
    // Predicated region
    $region6: #{tpu_custom_call.1} parent=1 // pred_check
      _
    $region7: #{tpu_custom_call.1} parent=1 // pred_check_branch
      %18 = sbr.rel (0) target = $region9
    $region8: #{tpu_custom_call.1} parent=1 // pred_region
      _
    $region9: #{tpu_custom_call.1} parent=1 // pred_fallthru
      _
    // Predicated region
    $region10: #{tpu_custom_call.1} parent=1 // pred_check
      _
    $region11: #{tpu_custom_call.1} parent=1 // pred_check_branch
      %20 = sbr.rel (0) target = $region13
    $region12: #{tpu_custom_call.1} parent=1 // pred_region
      _
    $region13: #{tpu_custom_call.1} parent=1 // pred_fallthru
      _
    // Predicated region
    $region14: #{tpu_custom_call.1} parent=1 // pred_check
      _
    $region15: #{tpu_custom_call.1} parent=1 // pred_check_branch
      %22 = sbr.rel (0) target = $region17
    $region16: #{tpu_custom_call.1} parent=1 // pred_region
      _
    $region17: #{tpu_custom_call.1} parent=1 // pred_fallthru
      _
    // Predicated region
    $region18: #{tpu_custom_call.1} parent=1 // pred_check
      _
    $region19: #{tpu_custom_call.1} parent=1 // pred_check_branch
      %24 = sbr.rel (0) target = $region21
    $region20: #{tpu_custom_call.1} parent=1 // pred_region
      _
    $region21: #{tpu_custom_call.1} parent=1 // pred_fallthru
      _
    // Predicated region
    $region22: #{tpu_custom_call.1} parent=1 // pred_check
      _
    $region23: #{tpu_custom_call.1} parent=1 // pred_check_branch
      %26 = sbr.rel (0) target = $region25
    $region24: #{tpu_custom_call.1} parent=1 // pred_region
      _
    $region25: #{tpu_custom_call.1} parent=1 // pred_fallthru
      _
    // Predicated region
    $region26: #{tpu_custom_call.1} parent=1 // pred_check
      _
    $region27: #{tpu_custom_call.1} parent=1 // pred_check_branch
      %28 = sbr.rel (0) target = $region29
    $region28: #{tpu_custom_call.1} parent=1 // pred_region
      _
    $region29: #{tpu_custom_call.1} parent=1 // pred_fallthru
      _
    // Predicated region
    $region30: #{tpu_custom_call.1} parent=1 // pred_check
      _
    $region31: #{tpu_custom_call.1} parent=1 // pred_check_branch
      %30 = sbr.rel (0) target = $region33
    $region32: #{tpu_custom_call.1} parent=1 // pred_region
      _
    $region33: #{tpu_custom_call.1} parent=1 // pred_fallthru
      _
    // Predicated region
    $region34: #{tpu_custom_call.1} parent=1 // pred_check
      _
    $region35: #{tpu_custom_call.1} parent=1 // pred_check_branch
      %32 = sbr.rel (0) target = $region37
    $region36: #{tpu_custom_call.1} parent=1 // pred_region
      _
    $region37: #{tpu_custom_call.1} parent=1 // pred_fallthru
      _
    %v33 = vld [vmem:[%s0] sm:$0xff]
    %v34 = vld [vmem:[%s0 + $0x8] sm:$0xff]
    %v35 = vlaneseq
    %v36 = vand.u32 %v35, 127
    %v37 = vld [vmem:[%s1] sm:$0xff]
    %38 = vrot.lane.b32.xlu0 %v33, 3
    %v39 = vpop.permute.xlu0 %38
    %vm40 = vcmp.ge.s32.totalorder %v36, 3
    %v41 = vsel %vm40, %v39, 0.0
    %42 = vrot.lane.b32.xlu0 %v33, 2
    %v43 = vpop.permute.xlu0 %42
    %vm44 = vcmp.ge.s32.totalorder %v36, 2
    %v45 = vsel %vm44, %v43, 0.0
    %46 = vrot.lane.b32.xlu0 %v33, 1
    %v47 = vpop.permute.xlu0 %46
    %vm48 = vcmp.ge.s32.totalorder %v36, 1
    %v49 = vsel %vm48, %v47, 0.0
    %50 = vrot.lane.b32.xlu0 %v33, 127
    %v51 = vpop.permute.xlu0 %50
    %vm52 = vcmp.lt.s32.totalorder %v36, 127
    %v53 = vsel %vm52, %v51, 0.0
    %54 = vrot.lane.b32.xlu0 %v33, 126
    %v55 = vpop.permute.xlu0 %54
    %vm56 = vcmp.lt.s32.totalorder %v36, 126
    %v57 = vsel %vm56, %v55, 0.0
    %58 = vrot.lane.b32.xlu0 %v33, 125
    %v59 = vpop.permute.xlu0 %58
    %vm60 = vcmp.lt.s32.totalorder %v36, 125
    %v61 = vsel %vm60, %v59, 0.0
    %vm62 = vcmask 457728
    %v64 = vsel %vm62, %v37, 0
    %66 = vmatpush.msra.mxu0 0.0
    %67 = vmatpush.msra.mxu0 0.0
    %68 = vmatpush.msra.mxu0 0.0
    %69 = vmatpush.msra.mxu0 0.0
    %70 = vmatpush.msra.mxu0 0.0
    %71 = vmatpush.msra.mxu0 0.0
    %72 = vmatpush.msra.mxu0 0.0
    %73 = vmatpush.msra.mxu0 0.0
    %74 = vmatpush.msra.mxu0 0.0
    %75 = vmatpush.msra.mxu0 %v61
    %76 = vmatpush.msra.mxu0 %v57
    %77 = vmatpush.msra.mxu0 %v53
    %78 = vmatpush.msra.mxu0 %v33
    %79 = vmatpush.msra.mxu0 %v49
    %80 = vmatpush.msra.mxu0 %v45
    %81 = vmatpush.msra.mxu0 %v41
    %82 = vmatmul.f32.gmra.mxu0 %v64
    %v83 = vpop.f32.mrf.mxu0
    %v84 = vadd.f32 0.0, %v83
    %85 = vdwg.mxu0
    %86 = vrot.lane.b32.xlu0 %v34, 3
    %v87 = vpop.permute.xlu0 %86
    %v88 = vsel %vm40, %v87, 0.0
    %89 = vrot.lane.b32.xlu0 %v34, 2
    %v90 = vpop.permute.xlu0 %89
    %v91 = vsel %vm44, %v90, 0.0
    %92 = vrot.lane.b32.xlu0 %v34, 1
    %v93 = vpop.permute.xlu0 %92
    %v94 = vsel %vm48, %v93, 0.0
    %95 = vrot.lane.b32.xlu0 %v34, 127
    %v96 = vpop.permute.xlu0 %95
    %v97 = vsel %vm52, %v96, 0.0
    %98 = vrot.lane.b32.xlu0 %v34, 126
    %v99 = vpop.permute.xlu0 %98
    %v100 = vsel %vm56, %v99, 0.0
    %101 = vrot.lane.b32.xlu0 %v34, 125
    %v102 = vpop.permute.xlu0 %101
    %v103 = vsel %vm60, %v102, 0.0
    %104 = vmatpush.msra.mxu0 0.0
    %105 = vmatpush.msra.mxu0 0.0
    %106 = vmatpush.msra.mxu0 0.0
    %107 = vmatpush.msra.mxu0 0.0
    %108 = vmatpush.msra.mxu0 0.0
    %109 = vmatpush.msra.mxu0 0.0
    %110 = vmatpush.msra.mxu0 0.0
    %111 = vmatpush.msra.mxu0 0.0
    %112 = vmatpush.msra.mxu0 0.0
    %113 = vmatpush.msra.mxu0 %v103
    %114 = vmatpush.msra.mxu0 %v100
    %115 = vmatpush.msra.mxu0 %v97
    %116 = vmatpush.msra.mxu0 %v34
    %117 = vmatpush.msra.mxu0 %v94
    %118 = vmatpush.msra.mxu0 %v91
    %119 = vmatpush.msra.mxu0 %v88
    %120 = vmatmul.f32.gmra.mxu0 %v64
    %v121 = vpop.f32.mrf.mxu0
    %v122 = vadd.f32 0.0, %v121
    %123 = vdwg.mxu0
    %v124 = vld [vmem:[%s2] sm:$0xff]
    %126 = vset.pattern.permute.xlu0 0
    %127 = vperm.xlu0 %126, %v124
    %v128 = vpop.permute.xlu0 %127
    %v130 = vadd.f32 %v84, %v128
    %v131 = vadd.f32 %v122, %v128
    %v132 = vadd.f32 %v130, %v131
    %133 = vadd.xlane.f32.xlu0 %v132
    %v134 = vpop.xlane.xlu0 %133
    %v135 = vmul.f32 %v130, %v130
    %v136 = vmul.f32 %v131, %v131
    %v137 = vadd.f32 %v135, %v136
    %138 = vadd.xlane.f32.xlu0 %v137
    %v139 = vpop.xlane.xlu0 %138
    %v140 = vmul.f32 %v134, 0.00390625
    %v141 = vmul.f32 %v139, 0.00390625
    %v142 = vmul.f32 %v140, %v140
    %v143 = vsub.f32 %v141, %v142
    %v144 = vsub.f32 %v130, %v140
    %v145 = vsub.f32 %v131, %v140
    %v146 = vadd.f32 %v143, 1e-05
    %v147 = vrsqrt.pop %v146
    %v148 = vmul.f32 %v147, %v146
    %v149 = vmul.f32 %v148, %v147
    %v150 = vmul.f32 0.5, %v149
    %v151 = vsub.f32 1.5, %v150
    %v152 = vmul.f32 %v147, %v151
    %vm153 = vweird.f32 %v146
    %vm154 = vweird.f32 %v147
    %vm155 = vmor %vm153, %vm154
    %v156 = vsel %vm155, %v147, %v152
    %v157 = vmul.f32 %v144, %v156
    %v158 = vmul.f32 %v145, %v156
    %v159 = vld [vmem:[%s3] sm:$0xff]
    %161 = vset.pattern.permute.xlu0 0
    %162 = vperm.xlu0 %161, %v159
    %v163 = vpop.permute.xlu0 %162
    %v165 = vmul.f32 %v157, %v163
    %v166 = vmul.f32 %v158, %v163
    %v167 = vld [vmem:[%s4] sm:$0xff]
    %169 = vset.pattern.permute.xlu0 0
    %170 = vperm.xlu0 %169, %v167
    %v171 = vpop.permute.xlu0 %170
    %v173 = vadd.f32 %v165, %v171
    %v174 = vadd.f32 %v166, %v171
    %v175 = vmax.f32 %v173, 0.0
    %v176 = vmax.f32 %v174, 0.0
    %v177 = vld [vmem:[%s5] sm:$0xff]
    %178 = vrot.lane.b32.xlu0 %v175, 3
    %v179 = vpop.permute.xlu0 %178
    %v180 = vsel %vm40, %v179, 0.0
    %181 = vrot.lane.b32.xlu0 %v175, 2
    %v182 = vpop.permute.xlu0 %181
    %v183 = vsel %vm44, %v182, 0.0
    %184 = vrot.lane.b32.xlu0 %v175, 1
    %v185 = vpop.permute.xlu0 %184
    %v186 = vsel %vm48, %v185, 0.0
    %187 = vrot.lane.b32.xlu0 %v175, 127
    %v188 = vpop.permute.xlu0 %187
    %v189 = vsel %vm52, %v188, 0.0
    %190 = vrot.lane.b32.xlu0 %v175, 126
    %v191 = vpop.permute.xlu0 %190
    %v192 = vsel %vm56, %v191, 0.0
    %193 = vrot.lane.b32.xlu0 %v175, 125
    %v194 = vpop.permute.xlu0 %193
    %v195 = vsel %vm60, %v194, 0.0
    %v197 = vsel %vm62, %v177, 0
    %199 = vmatpush.msra.mxu0 0.0
    %200 = vmatpush.msra.mxu0 0.0
    %201 = vmatpush.msra.mxu0 0.0
    %202 = vmatpush.msra.mxu0 0.0
    %203 = vmatpush.msra.mxu0 0.0
    %204 = vmatpush.msra.mxu0 0.0
    %205 = vmatpush.msra.mxu0 0.0
    %206 = vmatpush.msra.mxu0 0.0
    %207 = vmatpush.msra.mxu0 0.0
    %208 = vmatpush.msra.mxu0 %v195
    %209 = vmatpush.msra.mxu0 %v192
    %210 = vmatpush.msra.mxu0 %v189
    %211 = vmatpush.msra.mxu0 %v175
    %212 = vmatpush.msra.mxu0 %v186
    %213 = vmatpush.msra.mxu0 %v183
    %214 = vmatpush.msra.mxu0 %v180
    %215 = vmatmul.f32.gmra.mxu0 %v197
    %v216 = vpop.f32.mrf.mxu0
    %v217 = vadd.f32 0.0, %v216
    %218 = vdwg.mxu0
    %219 = vrot.lane.b32.xlu0 %v176, 3
    %v220 = vpop.permute.xlu0 %219
    %v221 = vsel %vm40, %v220, 0.0
    %222 = vrot.lane.b32.xlu0 %v176, 2
    %v223 = vpop.permute.xlu0 %222
    %v224 = vsel %vm44, %v223, 0.0
    %225 = vrot.lane.b32.xlu0 %v176, 1
    %v226 = vpop.permute.xlu0 %225
    %v227 = vsel %vm48, %v226, 0.0
    %228 = vrot.lane.b32.xlu0 %v176, 127
    %v229 = vpop.permute.xlu0 %228
    %v230 = vsel %vm52, %v229, 0.0
    %231 = vrot.lane.b32.xlu0 %v176, 126
    %v232 = vpop.permute.xlu0 %231
    %v233 = vsel %vm56, %v232, 0.0
    %234 = vrot.lane.b32.xlu0 %v176, 125
    %v235 = vpop.permute.xlu0 %234
    %v236 = vsel %vm60, %v235, 0.0
    %237 = vmatpush.msra.mxu0 0.0
    %238 = vmatpush.msra.mxu0 0.0
    %239 = vmatpush.msra.mxu0 0.0
    %240 = vmatpush.msra.mxu0 0.0
    %241 = vmatpush.msra.mxu0 0.0
    %242 = vmatpush.msra.mxu0 0.0
    %243 = vmatpush.msra.mxu0 0.0
    %244 = vmatpush.msra.mxu0 0.0
    %245 = vmatpush.msra.mxu0 0.0
    %246 = vmatpush.msra.mxu0 %v236
    %247 = vmatpush.msra.mxu0 %v233
    %248 = vmatpush.msra.mxu0 %v230
    %249 = vmatpush.msra.mxu0 %v176
    %250 = vmatpush.msra.mxu0 %v227
    %251 = vmatpush.msra.mxu0 %v224
    %252 = vmatpush.msra.mxu0 %v221
    %253 = vmatmul.f32.gmra.mxu0 %v197
    %v254 = vpop.f32.mrf.mxu0
    %v255 = vadd.f32 0.0, %v254
    %256 = vdwg.mxu0
    %v257 = vld [vmem:[%s6] sm:$0xff]
    %259 = vset.pattern.permute.xlu0 0
    %260 = vperm.xlu0 %259, %v257
    %v261 = vpop.permute.xlu0 %260
    %v263 = vadd.f32 %v217, %v261
    %v264 = vadd.f32 %v255, %v261
    %v265 = vadd.f32 %v263, %v264
    %266 = vadd.xlane.f32.xlu0 %v265
    %v267 = vpop.xlane.xlu0 %266
    %v268 = vmul.f32 %v263, %v263
    %v269 = vmul.f32 %v264, %v264
    %v270 = vadd.f32 %v268, %v269
    %271 = vadd.xlane.f32.xlu0 %v270
    %v272 = vpop.xlane.xlu0 %271
    %v273 = vmul.f32 %v267, 0.00390625
    %v274 = vmul.f32 %v272, 0.00390625
    %v275 = vmul.f32 %v273, %v273
    %v276 = vsub.f32 %v274, %v275
    %v277 = vsub.f32 %v263, %v273
    %v278 = vsub.f32 %v264, %v273
    %v279 = vadd.f32 %v276, 1e-05
    %v280 = vrsqrt.pop %v279
    %v281 = vmul.f32 %v280, %v279
    %v282 = vmul.f32 %v281, %v280
    %v283 = vmul.f32 0.5, %v282
    %v284 = vsub.f32 1.5, %v283
    %v285 = vmul.f32 %v280, %v284
    %vm286 = vweird.f32 %v279
    %vm287 = vweird.f32 %v280
    %vm288 = vmor %vm286, %vm287
    %v289 = vsel %vm288, %v280, %v285
    %v290 = vmul.f32 %v277, %v289
    %v291 = vmul.f32 %v278, %v289
    %v292 = vld [vmem:[%s7] sm:$0xff]
    %294 = vset.pattern.permute.xlu0 0
    %295 = vperm.xlu0 %294, %v292
    %v296 = vpop.permute.xlu0 %295
    %v298 = vmul.f32 %v290, %v296
    %v299 = vmul.f32 %v291, %v296
    %v300 = vld [vmem:[%s8] sm:$0xff]
    %302 = vset.pattern.permute.xlu0 0
    %303 = vperm.xlu0 %302, %v300
    %v304 = vpop.permute.xlu0 %303
    %v306 = vadd.f32 %v298, %v304
    %v307 = vadd.f32 %v299, %v304
    %v308 = vadd.f32 %v306, %v33
    %v309 = vadd.f32 %v307, %v34
    %v310 = vmax.f32 %v308, 0.0
    %v311 = vmax.f32 %v309, 0.0
    %312 = vst [vmem:[#allocation2] sm:$0xff] %v310
    %313 = vst [vmem:[#allocation2 + $0x8] sm:$0xff] %v311
    // Predicated region
    $region38: #{tpu_custom_call.1} parent=1 // pred_check
      _
    $region39: #{tpu_custom_call.1} parent=1 // pred_check_branch
      %315 = sbr.rel (0) target = $region41
    $region40: #{tpu_custom_call.1} parent=1 // pred_region
      %317 = vsyncadd [#allocation3], 0
      %s318 = sshll.u32 [#allocation2], 4
      %s319 = int_to_ptr.vmem [resolvable:$true] %s318
      %s320 = sshll.u32 %s9, 4
      %s321 = int_to_ptr.hbm [resolvable:$true] %s320
      %326 = dma.vmem_to_hbm [thread:$0]  %s319, 256, %s321, [#allocation3], 128, 128, 8
    $region41: #{tpu_custom_call.1} parent=1 // pred_fallthru
      _
    // Predicated region
    $region42: #{tpu_custom_call.1} parent=1 // pred_check
      _
    $region43: #{tpu_custom_call.1} parent=1 // pred_check_branch
      %328 = sbr.rel (0) target = $region45
    $region44: #{tpu_custom_call.1} parent=1 // pred_region
      %330 = dma.done [#allocation3], 256
    $region45: #{tpu_custom_call.1} parent=1 // pred_fallthru
      _
    %331 = vsyncpa [#allocation3], 1

</llo_original>
